<compile_context>
chip_gen: v6e
topology: v6e:2x2x1
jax: 0.10.0
libtpu: 0.0.40
codegen_flags: <defaults>
</compile_context>

<pallas_src>
import functools

import jax
import jax.numpy as jnp
from jax.experimental import pallas as pl
from jax.experimental.pallas import tpu as pltpu


def _round_up(x, m):
    return ((x + m - 1) // m) * m


def _pick_tile_d(D, d, itemsize, per_buffer_bytes=8 << 20):
    # ~8 MiB per streamed W^T buffer (x2 double-buffering -> ~16 MiB resident) keeps
    # each grid step well above the ~0.35 us per-step overhead (HBM-roofline regime)
    # while fitting v7x's 64 MiB VMEM once vmem_limit_bytes is raised; trivially fits
    # v5e/v6e's 128 MiB.
    by_vmem = max(128, ((per_buffer_bytes // (itemsize * max(d, 1))) // 128) * 128)
    return int(min(by_vmem, _round_up(D, 128)))


def _dense_projection_kernel(theta_d_ref, w_t_ref, theta_0_ref, o_ref):
    # theta_d_ref: (1, d)       resident across the whole grid
    # w_t_ref:     (d, TILE_D)  streamed tile of W^T (the HBM-bound operand)
    # theta_0_ref: (1, TILE_D)  lane-dense row tile (aliased with the output)
    # o_ref:       (1, TILE_D)  lane-dense output tile
    proj = jnp.dot(theta_d_ref[...], w_t_ref[...],
                   preferred_element_type=jnp.float32)
    o_ref[...] = (theta_0_ref[...].astype(jnp.float32) + proj).astype(o_ref.dtype)


@functools.partial(jax.jit, static_argnames=("tile_d",))
def _dense_projection_apply(w_t, theta_d, theta_0, *, tile_d):
    """theta_0 + (theta_d^T @ W^T)[:D], with W^T already transposed/padded offline."""
    d, D_pad = w_t.shape
    D = theta_0.size
    assert D_pad == _round_up(D, tile_d), "prepared W^T padding does not match theta_0"
    num_tiles = D_pad // tile_d
    out_dtype = theta_0.dtype

    # Cheap per-call glue: only O(d) + O(D) elements, negligible vs the W stream.
    theta_d_row = theta_d.reshape(1, d).astype(w_t.dtype)
    theta_0_row = theta_0.reshape(1, D).astype(out_dtype)
    if D_pad != D:
        theta_0_row = jnp.pad(theta_0_row, ((0, 0), (0, D_pad - D)))

    w_itemsize = jnp.dtype(w_t.dtype).itemsize
    out_itemsize = jnp.dtype(out_dtype).itemsize

    # Scoped-VMEM budget: 2x double-buffered W tile (sublane-padded) + 2x2 row tiles
    # + headroom; raised above the v5e default when big tiles are in play, capped at
    # 48 MiB to stay inside v7x's 64 MiB physical VMEM.
    tile_w_bytes = max(d, 8) * tile_d * w_itemsize
    needed = 2 * tile_w_bytes + 4 * tile_d * max(out_itemsize, 4) + (2 << 20)
    vmem_limit = int(min(48 << 20, max(needed, 16 << 20)))

    cost = pl.CostEstimate(
        flops=2 * D_pad * d,
        transcendentals=0,
        bytes_accessed=d * D_pad * w_itemsize + 2 * D_pad * out_itemsize + d * w_itemsize,
    )

    out_row = pl.pallas_call(
        _dense_projection_kernel,
        out_shape=jax.ShapeDtypeStruct((1, D_pad), out_dtype),
        grid=(num_tiles,),
        in_specs=[
            pl.BlockSpec((1, d), lambda i: (0, 0)),        # theta_d^T: resident
            pl.BlockSpec((d, tile_d), lambda i: (0, i)),   # W^T: streamed over D
            pl.BlockSpec((1, tile_d), lambda i: (0, i)),   # theta_0 row tile
        ],
        out_specs=pl.BlockSpec((1, tile_d), lambda i: (0, i)),
        input_output_aliases={2: 0},                       # theta_0_row buffer -> out
        compiler_params=pltpu.CompilerParams(
            dimension_semantics=("parallel",),             # independent D tiles
            vmem_limit_bytes=vmem_limit,
        ),
        cost_estimate=cost,
    )(theta_d_row, w_t, theta_0_row)

    return out_row[0, :D].reshape(theta_0.shape)


class DenseProjection:
    """JAX/Pallas port of the PyTorch DenseProjection module.

    The fixed random projection W is prepared ONCE here (transpose to lane-dense
    W^T, optional bf16 cast, zero-pad D to a tile multiple) so the per-call jitted
    forward streams it straight from HBM with no layout copies.
    """

    def __init__(self, W, *, tile_d=None, w_dtype=None, xla_fallback_bytes=0):
        D, d = W.shape
        self.D, self.d = int(D), int(d)
        w_dtype = W.dtype if w_dtype is None else jnp.dtype(w_dtype)
        if tile_d is None:
            tile_d = _pick_tile_d(self.D, self.d, jnp.dtype(w_dtype).itemsize)
        assert tile_d % 128 == 0, "tile_d must be a multiple of 128 (lane width)"
        self.tile_d = int(tile_d)
        self.D_pad = _round_up(self.D, self.tile_d)
        # Set e.g. xla_fallback_bytes = 1 << 20 in production to skip the kernel for
        # tiny D where the fixed pallas_call + grid overhead exceeds the work.
        self.xla_fallback_bytes = int(xla_fallback_bytes)

        w_t = jnp.transpose(W).astype(w_dtype)            # (d, D), one-time cost
        if self.D_pad != self.D:
            w_t = jnp.pad(w_t, ((0, 0), (0, self.D_pad - self.D)))
        self.w_t = w_t

    def __call__(self, theta_d, theta_0):
        assert theta_0.size == self.D, "theta_0 must hold exactly D elements"
        if theta_d.ndim == 2:
            assert theta_d.shape == (self.d, 1), "theta_d must be a (d, 1) column vector"
        else:
            assert theta_d.shape == (self.d,), "theta_d must have d elements"

        w_bytes = self.d * self.D * jnp.dtype(self.w_t.dtype).itemsize
        if w_bytes < self.xla_fallback_bytes:
            # Tiny problem: plain XLA GEMV beats kernel dispatch overhead.
            td = theta_d.reshape(1, self.d).astype(self.w_t.dtype)
            proj = (td.astype(jnp.float32) @ self.w_t.astype(jnp.float32))[0, : self.D]
            return (theta_0.astype(jnp.float32)
                    + proj.reshape(theta_0.shape)).astype(theta_0.dtype)

        return _dense_projection_apply(self.w_t, theta_d, theta_0, tile_d=self.tile_d)


if __name__ == "__main__":
    key = jax.random.PRNGKey(0)
    k_w, k_td, k_t0, k_w2, k_td2, k_t02 = jax.random.split(key, 6)

    # ---- Case 1: d=32, D=300 (D NOT a multiple of 128) --------------------------
    # Exercises the pad-and-slice tail path and a multi-tile grid (tile_d=128 -> 3
    # tiles). W stays f32 to match the PyTorch reference numerics exactly.
    d, D = 32, 300
    W = jax.random.uniform(k_w, (D, d), dtype=jnp.float32)        # torch.rand-like
    theta_d = jax.random.normal(k_td, (d, 1), dtype=jnp.float32)
    theta_0 = jax.random.normal(k_t0, (D,), dtype=jnp.float32)

    proj = DenseProjection(W, tile_d=128)                         # W prepared once
    out = jax.block_until_ready(proj(theta_d, theta_0))

    ref = theta_0 + (W @ theta_d).reshape(theta_0.shape)
    assert out.shape == theta_0.shape
    assert jnp.allclose(out, ref, atol=1e-5, rtol=1e-5)

    # ---- Case 2: d=64, D=4096, bf16-streamed W (f32 accumulate) ------------------
    # Exercises the byte-budget tile picker (single 4096-lane tile) and the halved
    # HBM traffic path; compared against a bf16-quantized reference.
    d2, D2 = 64, 4096
    W2 = jax.random.uniform(k_w2, (D2, d2), dtype=jnp.float32)
    theta_d2 = jax.random.normal(k_td2, (d2, 1), dtype=jnp.float32)
    theta_0_2 = jax.random.normal(k_t02, (D2,), dtype=jnp.float32)

    proj2 = DenseProjection(W2, w_dtype=jnp.bfloat16)
    out2 = jax.block_until_ready(proj2(theta_d2, theta_0_2))

    W2_q = W2.astype(jnp.bfloat16).astype(jnp.float32)
    td2_q = theta_d2.astype(jnp.bfloat16).astype(jnp.float32)
    ref2 = theta_0_2 + (W2_q @ td2_q).reshape(theta_0_2.shape)
    assert out2.shape == theta_0_2.shape
    assert jnp.allclose(out2, ref2, atol=1e-3, rtol=1e-3)

    print("KERNEL_OK")
</pallas_src>

<mosaic_0001>
module attributes {stable_mosaic.version = 11 : i64} {
  func.func @_dense_projection_kernel(%arg0: i32, %arg1: memref<1x32xf32, #tpu.memory_space<vmem>>, %arg2: memref<32x128xf32, #tpu.memory_space<vmem>>, %arg3: memref<1x128xf32, #tpu.memory_space<vmem>>, %arg4: memref<1x128xf32, #tpu.memory_space<vmem>>) attributes {dimension_semantics = [#tpu.dimension_semantics<parallel>], iteration_bounds = array<i64: 3>, scalar_prefetch = 0 : i64, scratch_operands = 0 : i64, tpu.core_type = #tpu.core_type<tc>, window_params = [{pipeline_mode = #tpu.pipeline_mode<synchronous>, transform_indices = @transform_0, window_bounds = array<i64: 1, 32>}, {transform_indices = @transform_1, window_bounds = array<i64: 32, 128>}, {transform_indices = @transform_2, window_bounds = array<i64: 1, 128>}, {transform_indices = @transform_3, window_bounds = array<i64: 1, 128>}]} {
    %c0 = arith.constant 0 : index
    %c0_0 = arith.constant 0 : index
    %0 = vector.load %arg1[%c0, %c0_0] : memref<1x32xf32, #tpu.memory_space<vmem>>, vector<1x32xf32>
    %c0_1 = arith.constant 0 : index
    %c0_2 = arith.constant 0 : index
    %1 = vector.load %arg2[%c0_1, %c0_2] : memref<32x128xf32, #tpu.memory_space<vmem>>, vector<32x128xf32>
    %cst = arith.constant dense<0.000000e+00> : vector<1x128xf32>
    %2 = tpu.matmul %0, %1, %cst {dimension_numbers = #tpu.dot_dimension_numbers<[1], [0], [0], [1], [0, 0, 1, 1], [], []>} : vector<1x32xf32>, vector<32x128xf32>, vector<1x128xf32> -> vector<1x128xf32>
    %c0_3 = arith.constant 0 : index
    %c0_4 = arith.constant 0 : index
    %3 = vector.load %arg3[%c0_3, %c0_4] : memref<1x128xf32, #tpu.memory_space<vmem>>, vector<1x128xf32>
    %4 = arith.addf %3, %2 : vector<1x128xf32>
    %c0_5 = arith.constant 0 : index
    %c0_6 = arith.constant 0 : index
    %5 = vector.load %arg4[%c0_5, %c0_6] : memref<1x128xf32, #tpu.memory_space<vmem>>, vector<1x128xf32>
    tpu.vector_store %arg4[%c0_5, %c0_6], %4 {strides = array<i32>} : memref<1x128xf32, #tpu.memory_space<vmem>>, vector<1x128xf32>,
    return
  }
  func.func @transform_0(%arg0: i32) -> (i32, i32) {
    %c0_i32 = arith.constant 0 : i32
    %c0_i32_0 = arith.constant 0 : i32
    %c0_i32_1 = arith.constant 0 : i32
    return %c0_i32, %c0_i32_0 : i32, i32
  }
  func.func @transform_1(%arg0: i32) -> (i32, i32) {
    %c0_i32 = arith.constant 0 : i32
    %c0_i32_0 = arith.constant 0 : i32
    return %c0_i32, %arg0 : i32, i32
  }
  func.func @transform_2(%arg0: i32) -> (i32, i32) {
    %c0_i32 = arith.constant 0 : i32
    %c0_i32_0 = arith.constant 0 : i32
    return %c0_i32, %arg0 : i32, i32
  }
  func.func @transform_3(%arg0: i32) -> (i32, i32) {
    %c0_i32 = arith.constant 0 : i32
    %c0_i32_0 = arith.constant 0 : i32
    return %c0_i32, %arg0 : i32, i32
  }
}

</mosaic_0001>

<llo_original>
// kernel: _dense_projection_apply.1
$region0: #{_dense_projection_apply.1}
  #allocation0 [shape = 'u32[]', space=smem, size = 0x4, offset = 0x4, fixed_abs, tag = 'smem constant byte address 0x4 - core index']
  #allocation1 [shape = 'u32[144,128]{1,0:T(1,128)}', space=vmem, size = 0x12000, scoped, tag = 'internal scratch']
  %s0 = inlined_call_operand.vmem [shape: f32[1,32], index: 0, kind: input, shape index: {}]
  %s1 = inlined_call_operand.hbm [shape: f32[32,384], index: 1, kind: input, shape index: {}]
  %s2 = inlined_call_operand.vmem [shape: f32[1,384], index: 2, kind: input, shape index: {}, may-alias: {2,3}]
  %s3 = inlined_call_operand.vmem [shape: f32[1,384], index: 3, kind: output, shape index: {}, may-alias: {2,3}]
  %s4 = sld [smem:[#allocation0]]
  $region49: #{_dense_projection_apply.1} parent=0
    _
  %s6 = ssub.s32 1, %s4
  %s7 = scalar_select 0, %s6, %s4
  $region1: #{_dense_projection_apply.1} parent=0
    #allocation2 [shape = 'u8[32768]{0}', space=vmem, size = 0x8000, scoped, tag = 'input window, operand 1']
    #allocation3 [shape = 's32[2]{0}', space=sflag, size = 0x8, scoped, tag = 'scoped memory for _dense_projection_apply.1']
    %8 = vsyncpa [#allocation3], 0
    %s9 = scalar_lea.sflag [#allocation3], 1
    %10 = vsyncpa %s9, 0
    loop: start=0, step=1, limit=5
    $region2: #{_dense_projection_apply.1} parent=1 // loop_pre_header
      _
    $region3: #{_dense_projection_apply.1} parent=1 // loop_header
      %s12 = sphi 0, %s16
      %p13 = scmp.ge.s32.totalorder %s12, 5
      %s20 = sphi 0, %s20
      %s22 = sphi 0, %s20
      %s23 = sphi 0, %s22
      %s37 = sphi 0, %s23
      %s43 = sphi 0, %s45
      %s46 = sphi 0, %s43
      %s47 = sphi 0, %s46
      %s63 = sphi 0, %s47
      %s69 = sphi 0, %s71
      %s72 = sphi 0, %s69
      %s73 = sphi 0, %s72
      %s89 = sphi 0, %s73
      %s95 = sphi 0, %s97
      %s98 = sphi 0, %s95
      %s99 = sphi 0, %s98
      %s115 = sphi 0, %s99
    $region4: #{_dense_projection_apply.1} parent=1 // loop_header_branch
      %15 = sbr.rel (%p13) target = $region8
    $region5: #{_dense_projection_apply.1} parent=1 // loop_body
      %s17 = ssub.s32 %s12, 1
      %s18 = ssub.s32 %s12, 2
      %s19 = sadd.s32 %s12, 1
      %s21 = sadd.s32 %s20, 1
      %p24 = scmp.eq.s32.totalorder %s12, 2
      %p25 = scmp.ne.s32.totalorder %s20, %s22
      %p26 = scmp.eq.s32.totalorder %s12, 0
      %p27 = por %p25, %p26
      %p28 = scmp.ne.s32.totalorder %s20, %s22
      %p29 = scmp.eq.s32.totalorder %s17, 2
      %p30 = por %p28, %p29
      %p31 = scmp.ne.s32.totalorder %s22, %s23
      %p32 = scmp.eq.s32.totalorder %s17, 0
      %p33 = por %p31, %p32
      %p34 = scmp.ne.s32.totalorder %s22, %s23
      %p35 = scmp.eq.s32.totalorder %s18, 2
      %p36 = por %p34, %p35
      %p38 = scmp.ne.s32.totalorder %s23, %s37
      %p39 = scmp.eq.s32.totalorder %s18, 0
      %p40 = por %p38, %p39
      %s41 = ssub.s32 %s12, %s19
      %p42 = scmp.eq.s32.totalorder %s41, 0
      %s44 = sadd.s32 %s43, 1
      %s45 = scalar_select %p42, %s43, %s44
      %p48 = pneg %p42
      %p49 = scmp.eq.s32.totalorder %s12, 2
      %p50 = por %p48, %p49
      %p51 = scmp.ne.s32.totalorder %s43, %s46
      %p52 = scmp.eq.s32.totalorder %s12, 0
      %p53 = por %p51, %p52
      %p54 = scmp.ne.s32.totalorder %s43, %s46
      %p55 = scmp.eq.s32.totalorder %s17, 2
      %p56 = por %p54, %p55
      %p57 = scmp.ne.s32.totalorder %s46, %s47
      %p58 = scmp.eq.s32.totalorder %s17, 0
      %p59 = por %p57, %p58
      %p60 = scmp.ne.s32.totalorder %s46, %s47
      %p61 = scmp.eq.s32.totalorder %s18, 2
      %p62 = por %p60, %p61
      %p64 = scmp.ne.s32.totalorder %s47, %s63
      %p65 = scmp.eq.s32.totalorder %s18, 0
      %p66 = por %p64, %p65
      %s67 = ssub.s32 %s12, %s19
      %p68 = scmp.eq.s32.totalorder %s67, 0
      %s70 = sadd.s32 %s69, 1
      %s71 = scalar_select %p68, %s69, %s70
      %p74 = pneg %p68
      %p75 = scmp.eq.s32.totalorder %s12, 2
      %p76 = por %p74, %p75
      %p77 = scmp.ne.s32.totalorder %s69, %s72
      %p78 = scmp.eq.s32.totalorder %s12, 0
      %p79 = por %p77, %p78
      %p80 = scmp.ne.s32.totalorder %s69, %s72
      %p81 = scmp.eq.s32.totalorder %s17, 2
      %p82 = por %p80, %p81
      %p83 = scmp.ne.s32.totalorder %s72, %s73
      %p84 = scmp.eq.s32.totalorder %s17, 0
      %p85 = por %p83, %p84
      %p86 = scmp.ne.s32.totalorder %s72, %s73
      %p87 = scmp.eq.s32.totalorder %s18, 2
      %p88 = por %p86, %p87
      %p90 = scmp.ne.s32.totalorder %s73, %s89
      %p91 = scmp.eq.s32.totalorder %s18, 0
      %p92 = por %p90, %p91
      %s93 = ssub.s32 %s12, %s19
      %p94 = scmp.eq.s32.totalorder %s93, 0
      %s96 = sadd.s32 %s95, 1
      %s97 = scalar_select %p94, %s95, %s96
      %p100 = pneg %p94
      %p101 = scmp.eq.s32.totalorder %s12, 2
      %p102 = por %p100, %p101
      %p103 = scmp.ne.s32.totalorder %s95, %s98
      %p104 = scmp.eq.s32.totalorder %s12, 0
      %p105 = por %p103, %p104
      %p106 = scmp.ne.s32.totalorder %s95, %s98
      %p107 = scmp.eq.s32.totalorder %s17, 2
      %p108 = por %p106, %p107
      %p109 = scmp.ne.s32.totalorder %s98, %s99
      %p110 = scmp.eq.s32.totalorder %s17, 0
      %p111 = por %p109, %p110
      %p112 = scmp.ne.s32.totalorder %s98, %s99
      %p113 = scmp.eq.s32.totalorder %s18, 2
      %p114 = por %p112, %p113
      %p116 = scmp.ne.s32.totalorder %s99, %s115
      %p117 = scmp.eq.s32.totalorder %s18, 0
      %p118 = por %p116, %p117
      %p119 = scmp.le.s32.totalorder 1, %s12
      %p120 = scmp.lt.s32.totalorder %s12, 4
      %p121 = pnand %p119, %p120
      %p122 = pneg %p121
      // Predicated region
      $region9: #{_dense_projection_apply.1} parent=5 // pred_check
        _
      $region10: #{_dense_projection_apply.1} parent=5 // pred_check_branch
        %124 = sbr.rel (%p121) target = $region12
      $region11: #{_dense_projection_apply.1} parent=5 // pred_region
        %s125 = ssub.s32 %s12, 1
        // Predicated region
        $region13: #{_dense_projection_apply.1} parent=11 // pred_check
          %p126 = pneg %p33
        $region14: #{_dense_projection_apply.1} parent=11 // pred_check_branch
          %128 = sbr.rel (%p126) target = $region16
        $region15: #{_dense_projection_apply.1} parent=11 // pred_region
          _
        $region16: #{_dense_projection_apply.1} parent=11 // pred_fallthru
          _
      $region12: #{_dense_projection_apply.1} parent=5 // pred_fallthru
        _
      %p129 = scmp.lt.s32.totalorder %s12, 3
      // Predicated region
      $region17: #{_dense_projection_apply.1} parent=5 // pred_check
        %p130 = pneg %p129
      $region18: #{_dense_projection_apply.1} parent=5 // pred_check_branch
        %132 = sbr.rel (%p130) target = $region20
      $region19: #{_dense_projection_apply.1} parent=5 // pred_region
        // Predicated region
        $region21: #{_dense_projection_apply.1} parent=19 // pred_check
          %p133 = pneg %p53
        $region22: #{_dense_projection_apply.1} parent=19 // pred_check_branch
          %135 = sbr.rel (%p133) target = $region24
        $region23: #{_dense_projection_apply.1} parent=19 // pred_region
          %s136 = sand.u32 %s43, 1
          %s137 = scalar_lea.sflag [#allocation3], %s136
          %s138 = sand.u32 %s43, 1
          %s139 = smul.addr %s138, 32
          %s140 = scalar_lea.vmem [#allocation2], %s139
          %s142 = ssub.s32 512, 512
          %143 = vsyncadd %s137, %s142
          %s144 = smul.addr %s12, 128
          %s145 = scalar_lea.hbm %s1, %s144
          %s146 = sshll.u32 %s140, 4
          %s147 = int_to_ptr.vmem [resolvable:$true] %s146
          %152 = dma.hbm_to_vmem [thread:$0]  %s145, 512, %s147, %s137, 384, 128, 8
        $region24: #{_dense_projection_apply.1} parent=19 // pred_fallthru
          _
        // Predicated region
        $region25: #{_dense_projection_apply.1} parent=19 // pred_check
          %p153 = pneg %p79
        $region26: #{_dense_projection_apply.1} parent=19 // pred_check_branch
          %155 = sbr.rel (%p153) target = $region28
        $region27: #{_dense_projection_apply.1} parent=19 // pred_region
          %p156 = scmp.lt.s32.totalorder %s12, 2
          %s157 = scalar_select %p156, %s12, 2
          %s158 = scalar_lea.vmem %s2, %s157
        $region28: #{_dense_projection_apply.1} parent=19 // pred_fallthru
          _
      $region20: #{_dense_projection_apply.1} parent=5 // pred_fallthru
        _
      %p159 = scmp.le.s32.totalorder 1, %s12
      %p160 = scmp.lt.s32.totalorder %s12, 4
      %p161 = pnand %p159, %p160
      %p162 = pneg %p161
      // Predicated region
      $region29: #{_dense_projection_apply.1} parent=5 // pred_check
        _
      $region30: #{_dense_projection_apply.1} parent=5 // pred_check_branch
        %164 = sbr.rel (%p161) target = $region32
      $region31: #{_dense_projection_apply.1} parent=5 // pred_region
        %s165 = ssub.s32 %s12, 1
        %s166 = sand.u32 %s46, 1
        %s167 = scalar_lea.sflag [#allocation3], %s166
        %s168 = sand.u32 %s46, 1
        %s169 = smul.addr %s168, 32
        %s170 = scalar_lea.vmem [#allocation2], %s169
        // Predicated region
        $region33: #{_dense_projection_apply.1} parent=31 // pred_check
          %p171 = pneg %p59
        $region34: #{_dense_projection_apply.1} parent=31 // pred_check_branch
          %173 = sbr.rel (%p171) target = $region36
        $region35: #{_dense_projection_apply.1} parent=31 // pred_region
          %174 = dma.done %s167, 512
        $region36: #{_dense_projection_apply.1} parent=31 // pred_fallthru
          _
        %p175 = pneg %p33
        %p176 = pneg %p30
        %s177 = sand.u32 %s46, 1
        %s178 = scalar_lea.sflag [#allocation3], %s177
        %s179 = sand.u32 %s46, 1
        %s180 = smul.addr %s179, 32
        %s181 = scalar_lea.vmem [#allocation2], %s180
        %p182 = pneg %p59
        %p183 = pneg %p56
        %p184 = scmp.lt.s32.totalorder %s17, 2
        %s185 = scalar_select %p184, %s17, 2
        %s186 = scalar_lea.vmem %s2, %s185
        %p187 = pneg %p85
        %p188 = pneg %p82
        %p189 = pneg %p111
        %p190 = pneg %p108
        %p191 = scmp.lt.s32.totalorder %s17, 2
        %s192 = scalar_select %p191, %s17, 2
        %s193 = scalar_lea.vmem %s3, %s192
        %p194 = scmp.lt.s32.totalorder %s17, 2
        %s195 = scalar_select %p194, %s17, 2
        %s196 = scalar_lea.vmem %s2, %s195
        %p197 = scmp.lt.s32.totalorder %s17, 2
        %s198 = scalar_select %p197, %s17, 2
        %s199 = scalar_lea.vmem %s3, %s198
        %v200 = vld [vmem:[%s0] sm:$0x1]
        %v201 = vld [vmem:[%s170] sm:$0xff]
        %v202 = vld [vmem:[%s170 + $0x8] sm:$0xff]
        %v203 = vld [vmem:[%s170 + $0x10] sm:$0xff]
        %v204 = vld [vmem:[%s170 + $0x18] sm:$0xff]
        %vm205 = vcmask 261120
        %v207 = vsel %vm205, %v200, 0
        %209 = vmatprep.subr.mxu0 0.0
        %210 = vmatpush1.msra.mxu0 0.0
        %211 = vmatprep.subr.mxu0 0.0
        %212 = vmatpush1.msra.mxu0 0.0
        %213 = vmatprep.subr.mxu0 0.0
        %214 = vmatpush1.msra.mxu0 0.0
        %215 = vmatprep.subr.mxu0 0.0
        %216 = vmatpush1.msra.mxu0 0.0
        %217 = vmatprep.subr.mxu0 0.0
        %218 = vmatpush1.msra.mxu0 0.0
        %219 = vmatprep.subr.mxu0 0.0
        %220 = vmatpush1.msra.mxu0 0.0
        %221 = vmatprep.subr.mxu0 0.0
        %222 = vmatpush1.msra.mxu0 0.0
        %223 = vmatprep.subr.mxu0 0.0
        %224 = vmatpush1.msra.mxu0 0.0
        %225 = vmatprep.subr.mxu0 0.0
        %226 = vmatpush1.msra.mxu0 0.0
        %227 = vmatprep.subr.mxu0 0.0
        %228 = vmatpush1.msra.mxu0 0.0
        %229 = vmatprep.subr.mxu0 0.0
        %230 = vmatpush1.msra.mxu0 0.0
        %231 = vmatprep.subr.mxu0 0.0
        %232 = vmatpush1.msra.mxu0 0.0
        %233 = vmatprep.subr.mxu0 0.0
        %234 = vmatpush1.msra.mxu0 %v204
        %235 = vmatprep.subr.mxu0 0.0
        %236 = vmatpush1.msra.mxu0 %v203
        %237 = vmatprep.subr.mxu0 0.0
        %238 = vmatpush1.msra.mxu0 %v202
        %239 = vmatprep.subr.mxu0 0.0
        %240 = vmatpush1.msra.mxu0 %v201
        %241 = vmatprep.subr.mxu0 0.0
        %242 = vmatpush2.msra.mxu0 0.0
        %243 = vmatprep.subr.mxu0 0.0
        %244 = vmatpush2.msra.mxu0 0.0
        %245 = vmatprep.subr.mxu0 0.0
        %246 = vmatpush2.msra.mxu0 0.0
        %247 = vmatprep.subr.mxu0 0.0
        %248 = vmatpush2.msra.mxu0 0.0
        %249 = vmatprep.subr.mxu0 0.0
        %250 = vmatpush2.msra.mxu0 0.0
        %251 = vmatprep.subr.mxu0 0.0
        %252 = vmatpush2.msra.mxu0 0.0
        %253 = vmatprep.subr.mxu0 0.0
        %254 = vmatpush2.msra.mxu0 0.0
        %255 = vmatprep.subr.mxu0 0.0
        %256 = vmatpush2.msra.mxu0 0.0
        %257 = vmatprep.subr.mxu0 0.0
        %258 = vmatpush2.msra.mxu0 0.0
        %259 = vmatprep.subr.mxu0 0.0
        %260 = vmatpush2.msra.mxu0 0.0
        %261 = vmatprep.subr.mxu0 0.0
        %262 = vmatpush2.msra.mxu0 0.0
        %263 = vmatprep.subr.mxu0 0.0
        %264 = vmatpush2.msra.mxu0 0.0
        %265 = vmatprep.subr.mxu0 0.0
        %266 = vmatpush2.msra.mxu0 0.0
        %267 = vmatprep.subr.mxu0 0.0
        %268 = vmatpush2.msra.mxu0 0.0
        %269 = vmatprep.subr.mxu0 0.0
        %270 = vmatpush2.msra.mxu0 0.0
        %271 = vmatprep.subr.mxu0 0.0
        %272 = vmatpush2.msra.mxu0 0.0
        %273 = vmatprep.mubr.f32.mxu0 0.0
        %274 = vmatmul.mubr.f32.gmra.mxu0 %v207
        %v275 = vpop.f32.mrf.mxu0
        %v276 = vadd.f32 0.0, %v275
        %v277 = vpop.f32.mrf.mxu0
        %278 = vdwg.mxu0
        %v279 = vld [vmem:[%s196] sm:$0x1]
        %v280 = vadd.f32 %v279, %v276
        %281 = vst [vmem:[%s199] sm:$0x1] %v280
        %p282 = scmp.lt.s32.totalorder %s17, 2
        %s283 = scalar_select %p282, %s17, 2
        %s284 = scalar_lea.vmem %s3, %s283
        // Predicated region
        $region37: #{_dense_projection_apply.1} parent=31 // pred_check
          %p285 = pneg %p108
        $region38: #{_dense_projection_apply.1} parent=31 // pred_check_branch
          %287 = sbr.rel (%p285) target = $region40
        $region39: #{_dense_projection_apply.1} parent=31 // pred_region
          _
        $region40: #{_dense_projection_apply.1} parent=31 // pred_fallthru
          _
      $region32: #{_dense_projection_apply.1} parent=5 // pred_fallthru
        _
      %p288 = scmp.le.s32.totalorder 2, %s12
      // Predicated region
      $region41: #{_dense_projection_apply.1} parent=5 // pred_check
        %p289 = pneg %p288
      $region42: #{_dense_projection_apply.1} parent=5 // pred_check_branch
        %291 = sbr.rel (%p289) target = $region44
      $region43: #{_dense_projection_apply.1} parent=5 // pred_region
        %s292 = ssub.s32 %s12, 2
        // Predicated region
        $region45: #{_dense_projection_apply.1} parent=43 // pred_check
          %p293 = pneg %p114
        $region46: #{_dense_projection_apply.1} parent=43 // pred_check_branch
          %295 = sbr.rel (%p293) target = $region48
        $region47: #{_dense_projection_apply.1} parent=43 // pred_region
          %p296 = scmp.lt.s32.totalorder %s18, 2
          %s297 = scalar_select %p296, %s18, 2
          %s298 = scalar_lea.vmem %s3, %s297
        $region48: #{_dense_projection_apply.1} parent=43 // pred_fallthru
          _
      $region44: #{_dense_projection_apply.1} parent=5 // pred_fallthru
        _
    $region6: #{_dense_projection_apply.1} parent=1 // loop_footer
      %s16 = sadd.s32 1, %s12
    $region7: #{_dense_projection_apply.1} parent=1 // loop_footer_branch
      %11 = sbr.rel target = $region3
    $region8: #{_dense_projection_apply.1} parent=1 // loop_exit
      _
    %299 = vsyncpa [#allocation3], 1
    %s300 = scalar_lea.sflag [#allocation3], 1
    %301 = vsyncpa %s300, 1

</llo_original>
